<compile_context>
chip_gen: v7x
topology: tpu7x:2x2x1
jax: 0.10.0
libtpu: 0.0.40
codegen_flags: <defaults>
</compile_context>

<pallas_src>
import functools
import math

import jax
import jax.numpy as jnp
from jax.experimental import pallas as pl
from jax.experimental.pallas import tpu as pltpu

_LOG_EPS = math.log(1e-5)
_HID = 64


def _round_up(x, m):
    return (x + m - 1) // m * m


# ----------------------------------------------------------------------------
# Kernel (transposed layout: classes on sublanes, samples on lanes)
# ----------------------------------------------------------------------------
def _gated_ensembler_kernel(
    l1_ref, l2_ref,           # [C, tm] each: transposed logits
    wpe_ref,                  # [64, 2C+2] attn-1 weight for stacked rows [p1; p2; e1; e2]
    ba1_ref,                  # [64, 1]
    wg_ref, bg_ref,           # [1, 64], [1, 1]  collapsed gate head (col0 - col1)
    wf1_ref, bf1_ref,         # [64, C], [64, 1]
    wf2_ref, bf2_ref,         # [C, 64], [C, 1]
    out_ref,                  # [C, tm]
    pe_ref,                   # VMEM scratch [2C+2, tm] f32 (softmaxes + entropy rows)
):
    C = out_ref.shape[0]
    l1 = l1_ref[...].astype(jnp.float32)
    l2 = l2_ref[...].astype(jnp.float32)
    # NOTE: on the (unpadded) partial last block, out-of-range lanes hold garbage; all
    # ops below are column-independent, so garbage never contaminates valid columns and
    # the masked output store drops it.

    def softmax_entropy_into(l, p_row, e_row):
        m = jnp.max(l, axis=0, keepdims=True)             # [1, tm] sublane reduction
        lm = l - m
        ex = jnp.exp(lm)
        s = jnp.sum(ex, axis=0, keepdims=True)            # [1, tm]
        inv_s = pl.reciprocal(s)                          # one reciprocal per column (EUP)
        p = ex * inv_s                                    # softmax(l)
        # log(clamp(p, min=1e-5)) == max((l - m) - log s, log 1e-5): ONE log per column.
        log_p = jnp.maximum(lm - jnp.log(s), _LOG_EPS)
        e = -jnp.sum(p * log_p, axis=0, keepdims=True)    # entropy, [1, tm]
        pe_ref[p_row:p_row + C, :] = p
        pe_ref[e_row:e_row + 1, :] = e

    softmax_entropy_into(l1, 0, 2 * C)
    softmax_entropy_into(l2, C, 2 * C + 1)

    # attn first linear: a single K = 2C+2 matmul over [p1; p2; e1; e2]
    h = jnp.dot(wpe_ref[...], pe_ref[...], preferred_element_type=jnp.float32) + ba1_ref[...]
    h = jnp.maximum(h, 0.0)                               # ReLU, [64, tm]

    # softmax over the 2 gate logits == sigmoid of their difference
    d = jnp.dot(wg_ref[...], h, preferred_element_type=jnp.float32) + bg_ref[...]   # [1, tm]
    w0 = pl.reciprocal(1.0 + jnp.exp(-d))                 # sigmoid on a [1, tm] row
    y = l2 + w0 * (l1 - l2)                               # gated blend, [C, tm]

    # fuser MLP
    h2 = jnp.maximum(
        jnp.dot(wf1_ref[...], y, preferred_element_type=jnp.float32) + bf1_ref[...], 0.0
    )                                                     # [64, tm]
    out = jnp.dot(wf2_ref[...], h2, preferred_element_type=jnp.float32) + bf2_ref[...]
    out_ref[...] = out.astype(out_ref.dtype)              # [C, tm], lane-dense store


# ----------------------------------------------------------------------------
# Weight plumbing: [out, in] orientation for the transposed kernel
# ----------------------------------------------------------------------------
def _prep_weights(params, C):
    wa1 = params["w_a1"]                                   # [(C+1)*2, 64]; rows = [p1, e1, p2, e2]
    # reorder to the kernel's scratch row order [p1, p2, e1, e2]
    wpe = jnp.concatenate(
        [wa1[0:C], wa1[C + 1:2 * C + 1], wa1[C:C + 1], wa1[2 * C + 1:2 * C + 2]], axis=0
    ).T                                                    # [64, 2C+2]
    ba1 = params["b_a1"].T                                 # [64, 1]
    wa2 = params["w_a2"]                                   # [64, 2]
    wg = (wa2[:, 0:1] - wa2[:, 1:2]).T                     # [1, 64]  gate-logit difference
    bg = params["b_a2"][:, 0:1] - params["b_a2"][:, 1:2]   # [1, 1]
    wf1 = params["w_f1"].T                                 # [64, C]
    bf1 = params["b_f1"].T                                 # [64, 1]
    wf2 = params["w_f2"].T                                 # [C, 64]
    bf2 = params["b_f2"].T                                 # [C, 1]
    return (wpe, ba1, wg, bg, wf1, bf1, wf2, bf2)


# ----------------------------------------------------------------------------
# Core entry point in [C, N] (transposed) layout — no layout plumbing at all
# ----------------------------------------------------------------------------
def _gated_ensembler_t(l1t, l2t, params, tm):
    C, N = l1t.shape
    weights = _prep_weights(params, C)

    # Big row tile amortizes per-grid-step overhead; capped so the grid has >= 2 steps
    # (keeps the second TensorCore busy on v7x).  The last block may be partial —
    # Pallas masks it, so N needs NO padding.
    tm_eff = max(128, min(tm, _round_up((N + 1) // 2, 128)))
    grid = (pl.cdiv(N, tm_eff),)

    io_spec = pl.BlockSpec((C, tm_eff), lambda i: (0, i))

    def full(arr):
        return pl.BlockSpec(arr.shape, lambda i: (0,) * arr.ndim)

    return pl.pallas_call(
        _gated_ensembler_kernel,
        out_shape=jax.ShapeDtypeStruct((C, N), l1t.dtype),
        grid_spec=pltpu.PrefetchScalarGridSpec(
            num_scalar_prefetch=0,
            grid=grid,
            in_specs=[io_spec, io_spec] + [full(w) for w in weights],
            out_specs=io_spec,
            scratch_shapes=[pltpu.VMEM((2 * C + 2, tm_eff), jnp.float32)],
        ),
        compiler_params=pltpu.CompilerParams(
            dimension_semantics=("parallel",),        # shards grid across TCs on v7x
            vmem_limit_bytes=48 * 1024 * 1024,        # headroom for tm=8192 on v5e (16 MiB scoped default)
        ),
    )(l1t, l2t, *weights)


@functools.partial(jax.jit, static_argnames=("tm",))
def gated_ensembler_t(l1t, l2t, params, *, tm=8192):
    """Transposed I/O: l1t, l2t are [C, N]; returns fused logits [C, N] (no transposes)."""
    return _gated_ensembler_t(l1t, l2t, params, tm)


@functools.partial(jax.jit, static_argnames=("tm",))
def gated_ensembler(l1, l2, params, *, tm=8192):
    """PyTorch-compatible I/O: l1, l2 are [N, C] logits; returns fused logits [N, C]."""
    # TODO(synk): if the surrounding model can carry activations in [C, N] layout, call
    # gated_ensembler_t directly and skip these two XLA transposes (pure HBM traffic).
    return _gated_ensembler_t(l1.T, l2.T, params, tm).T


# ----------------------------------------------------------------------------
# Pure-JAX reference (mirrors the PyTorch forward exactly)
# ----------------------------------------------------------------------------
def gated_ensembler_ref(l1, l2, params):
    def soft_ent(l):
        p = jax.nn.softmax(l, axis=-1)
        e = -jnp.sum(p * jnp.log(jnp.maximum(p, 1e-5)), axis=-1, keepdims=True)
        return jnp.concatenate([p, e], axis=-1)

    x = jnp.concatenate([soft_ent(l1), soft_ent(l2)], axis=-1)
    h = jnp.maximum(x @ params["w_a1"] + params["b_a1"], 0.0)
    w = jax.nn.softmax(h @ params["w_a2"] + params["b_a2"], axis=-1)
    y = jnp.sum(jnp.stack([l1, l2], axis=-1) * w[:, None, :], axis=-1)
    h2 = jnp.maximum(y @ params["w_f1"] + params["b_f1"], 0.0)
    return h2 @ params["w_f2"] + params["b_f2"]


# ----------------------------------------------------------------------------
# Deterministic parameter init (PyTorch-Linear-style uniform(-1/sqrt(fan_in)))
# ----------------------------------------------------------------------------
def init_params(key, num_classes):
    C = num_classes
    din_attn = (C + 1) * 2
    ks = jax.random.split(key, 8)

    def unif(k, shape, fan_in):
        bound = 1.0 / jnp.sqrt(fan_in)
        return jax.random.uniform(k, shape, jnp.float32, -bound, bound)

    return {
        "w_a1": unif(ks[0], (din_attn, _HID), din_attn),
        "b_a1": unif(ks[1], (1, _HID), din_attn),
        "w_a2": unif(ks[2], (_HID, 2), _HID),
        "b_a2": unif(ks[3], (1, 2), _HID),
        "w_f1": unif(ks[4], (C, _HID), C),
        "b_f1": unif(ks[5], (1, _HID), C),
        "w_f2": unif(ks[6], (_HID, C), _HID),
        "b_f2": unif(ks[7], (1, C), _HID),
    }


if __name__ == "__main__":
    num_classes = 8
    N = 300                                  # deliberately NOT a multiple of 128 or the tile
    key = jax.random.PRNGKey(0)
    k1, k2, kp = jax.random.split(key, 3)

    l1 = jax.random.normal(k1, (N, num_classes), jnp.float32)
    l2 = jax.random.normal(k2, (N, num_classes), jnp.float32)
    params = init_params(kp, num_classes)

    out = gated_ensembler(l1, l2, params)
    out = jax.block_until_ready(out)

    ref = gated_ensembler_ref(l1, l2, params)
    assert out.shape == (N, num_classes)
    err = float(jnp.max(jnp.abs(out - ref)))
    assert jnp.allclose(out, ref, atol=2e-4, rtol=2e-4), err

    # also exercise the transposed-layout entry point
    out_t = jax.block_until_ready(gated_ensembler_t(l1.T, l2.T, params))
    assert jnp.allclose(out_t.T, ref, atol=2e-4, rtol=2e-4)

    print("KERNEL_OK")
</pallas_src>

<mosaic_0001>
module attributes {stable_mosaic.version = 11 : i64} {
  func.func @_gated_ensembler_kernel(%arg0: i32, %arg1: memref<8x256xf32, #tpu.memory_space<vmem>>, %arg2: memref<8x256xf32, #tpu.memory_space<vmem>>, %arg3: memref<64x18xf32, #tpu.memory_space<vmem>>, %arg4: memref<64x1xf32, #tpu.memory_space<vmem>>, %arg5: memref<1x64xf32, #tpu.memory_space<vmem>>, %arg6: memref<1x1xf32, #tpu.memory_space<vmem>>, %arg7: memref<64x8xf32, #tpu.memory_space<vmem>>, %arg8: memref<64x1xf32, #tpu.memory_space<vmem>>, %arg9: memref<8x64xf32, #tpu.memory_space<vmem>>, %arg10: memref<8x1xf32, #tpu.memory_space<vmem>>, %arg11: memref<8x256xf32, #tpu.memory_space<vmem>>, %arg12: memref<18x256xf32, #tpu.memory_space<vmem>>) attributes {dimension_semantics = [#tpu.dimension_semantics<parallel>], iteration_bounds = array<i64: 2>, scalar_prefetch = 0 : i64, scratch_operands = 1 : i64, tpu.core_type = #tpu.core_type<tc>, window_params = [{transform_indices = @transform_0, window_bounds = array<i64: 8, 256>}, {transform_indices = @transform_1, window_bounds = array<i64: 8, 256>}, {pipeline_mode = #tpu.pipeline_mode<synchronous>, transform_indices = @transform_2, window_bounds = array<i64: 64, 18>}, {pipeline_mode = #tpu.pipeline_mode<synchronous>, transform_indices = @transform_3, window_bounds = array<i64: 64, 1>}, {pipeline_mode = #tpu.pipeline_mode<synchronous>, transform_indices = @transform_4, window_bounds = array<i64: 1, 64>}, {pipeline_mode = #tpu.pipeline_mode<synchronous>, transform_indices = @transform_5, window_bounds = array<i64: 1, 1>}, {pipeline_mode = #tpu.pipeline_mode<synchronous>, transform_indices = @transform_6, window_bounds = array<i64: 64, 8>}, {pipeline_mode = #tpu.pipeline_mode<synchronous>, transform_indices = @transform_7, window_bounds = array<i64: 64, 1>}, {pipeline_mode = #tpu.pipeline_mode<synchronous>, transform_indices = @transform_8, window_bounds = array<i64: 8, 64>}, {pipeline_mode = #tpu.pipeline_mode<synchronous>, transform_indices = @transform_9, window_bounds = array<i64: 8, 1>}, {transform_indices = @transform_10, window_bounds = array<i64: 8, 256>}]} {
    %c0 = arith.constant 0 : index
    %c0_0 = arith.constant 0 : index
    %0 = vector.load %arg1[%c0, %c0_0] : memref<8x256xf32, #tpu.memory_space<vmem>>, vector<8x256xf32>
    %c0_1 = arith.constant 0 : index
    %c0_2 = arith.constant 0 : index
    %1 = vector.load %arg2[%c0_1, %c0_2] : memref<8x256xf32, #tpu.memory_space<vmem>>, vector<8x256xf32>
    %cst = arith.constant dense<0xFF800000> : vector<256xf32>
    %2 = vector.multi_reduction <maximumf>, %0, %cst [0] : vector<8x256xf32> to vector<256xf32>
    %3 = vector.shape_cast %2 : vector<256xf32> to vector<1x256xf32>
    %4 = vector.broadcast %3 : vector<1x256xf32> to vector<8x256xf32>
    %5 = arith.subf %0, %4 : vector<8x256xf32>
    %6 = math.exp %5 : vector<8x256xf32>
    %cst_3 = arith.constant dense<0.000000e+00> : vector<256xf32>
    %7 = vector.multi_reduction <add>, %6, %cst_3 [0] : vector<8x256xf32> to vector<256xf32>
    %8 = vector.shape_cast %7 : vector<256xf32> to vector<1x256xf32>
    %9 = tpu.reciprocal %8 : vector<1x256xf32> -> vector<1x256xf32>
    %10 = vector.broadcast %9 : vector<1x256xf32> to vector<8x256xf32>
    %11 = arith.mulf %6, %10 : vector<8x256xf32>
    %12 = math.log %8 : vector<1x256xf32>
    %13 = vector.broadcast %12 : vector<1x256xf32> to vector<8x256xf32>
    %14 = arith.subf %5, %13 : vector<8x256xf32>
    %cst_4 = arith.constant -11.5129251 : f32
    %15 = vector.broadcast %cst_4 : f32 to vector<8x256xf32>
    %16 = arith.maximumf %14, %15 : vector<8x256xf32>
    %17 = arith.mulf %11, %16 : vector<8x256xf32>
    %cst_5 = arith.constant dense<0.000000e+00> : vector<256xf32>
    %18 = vector.multi_reduction <add>, %17, %cst_5 [0] : vector<8x256xf32> to vector<256xf32>
    %19 = vector.shape_cast %18 : vector<256xf32> to vector<1x256xf32>
    %cst_6 = arith.constant 0.000000e+00 : f32
    %20 = vector.broadcast %cst_6 : f32 to vector<1x256xf32>
    %21 = arith.subf %20, %19 : vector<1x256xf32>
    %c0_7 = arith.constant 0 : index
    %c0_8 = arith.constant 0 : index
    %22 = vector.load %arg12[%c0_7, %c0_8] : memref<18x256xf32, #tpu.memory_space<vmem>>, vector<8x256xf32>
    tpu.vector_store %arg12[%c0_7, %c0_8], %11 {strides = array<i32>} : memref<18x256xf32, #tpu.memory_space<vmem>>, vector<8x256xf32>,
    %c16 = arith.constant 16 : index
    %c0_9 = arith.constant 0 : index
    %23 = vector.load %arg12[%c16, %c0_9] : memref<18x256xf32, #tpu.memory_space<vmem>>, vector<1x256xf32>
    tpu.vector_store %arg12[%c16, %c0_9], %21 {strides = array<i32>} : memref<18x256xf32, #tpu.memory_space<vmem>>, vector<1x256xf32>,
    %cst_10 = arith.constant dense<0xFF800000> : vector<256xf32>
    %24 = vector.multi_reduction <maximumf>, %1, %cst_10 [0] : vector<8x256xf32> to vector<256xf32>
    %25 = vector.shape_cast %24 : vector<256xf32> to vector<1x256xf32>
    %26 = vector.broadcast %25 : vector<1x256xf32> to vector<8x256xf32>
    %27 = arith.subf %1, %26 : vector<8x256xf32>
    %28 = math.exp %27 : vector<8x256xf32>
    %cst_11 = arith.constant dense<0.000000e+00> : vector<256xf32>
    %29 = vector.multi_reduction <add>, %28, %cst_11 [0] : vector<8x256xf32> to vector<256xf32>
    %30 = vector.shape_cast %29 : vector<256xf32> to vector<1x256xf32>
    %31 = tpu.reciprocal %30 : vector<1x256xf32> -> vector<1x256xf32>
    %32 = vector.broadcast %31 : vector<1x256xf32> to vector<8x256xf32>
    %33 = arith.mulf %28, %32 : vector<8x256xf32>
    %34 = math.log %30 : vector<1x256xf32>
    %35 = vector.broadcast %34 : vector<1x256xf32> to vector<8x256xf32>
    %36 = arith.subf %27, %35 : vector<8x256xf32>
    %cst_12 = arith.constant -11.5129251 : f32
    %37 = vector.broadcast %cst_12 : f32 to vector<8x256xf32>
    %38 = arith.maximumf %36, %37 : vector<8x256xf32>
    %39 = arith.mulf %33, %38 : vector<8x256xf32>
    %cst_13 = arith.constant dense<0.000000e+00> : vector<256xf32>
    %40 = vector.multi_reduction <add>, %39, %cst_13 [0] : vector<8x256xf32> to vector<256xf32>
    %41 = vector.shape_cast %40 : vector<256xf32> to vector<1x256xf32>
    %cst_14 = arith.constant 0.000000e+00 : f32
    %42 = vector.broadcast %cst_14 : f32 to vector<1x256xf32>
    %43 = arith.subf %42, %41 : vector<1x256xf32>
    %c8 = arith.constant 8 : index
    %c0_15 = arith.constant 0 : index
    %44 = vector.load %arg12[%c8, %c0_15] : memref<18x256xf32, #tpu.memory_space<vmem>>, vector<8x256xf32>
    tpu.vector_store %arg12[%c8, %c0_15], %33 {strides = array<i32>} : memref<18x256xf32, #tpu.memory_space<vmem>>, vector<8x256xf32>,
    %c17 = arith.constant 17 : index
    %c0_16 = arith.constant 0 : index
    %45 = vector.load %arg12[%c17, %c0_16] : memref<18x256xf32, #tpu.memory_space<vmem>>, vector<1x256xf32>
    tpu.vector_store %arg12[%c17, %c0_16], %43 {strides = array<i32>} : memref<18x256xf32, #tpu.memory_space<vmem>>, vector<1x256xf32>,
    %c0_17 = arith.constant 0 : index
    %c0_18 = arith.constant 0 : index
    %46 = vector.load %arg3[%c0_17, %c0_18] : memref<64x18xf32, #tpu.memory_space<vmem>>, vector<64x18xf32>
    %c0_19 = arith.constant 0 : index
    %c0_20 = arith.constant 0 : index
    %47 = vector.load %arg12[%c0_19, %c0_20] : memref<18x256xf32, #tpu.memory_space<vmem>>, vector<18x256xf32>
    %cst_21 = arith.constant dense<0.000000e+00> : vector<64x256xf32>
    %48 = tpu.matmul %46, %47, %cst_21 {dimension_numbers = #tpu.dot_dimension_numbers<[1], [0], [0], [1], [0, 0, 1, 1], [], []>} : vector<64x18xf32>, vector<18x256xf32>, vector<64x256xf32> -> vector<64x256xf32>
    %c0_22 = arith.constant 0 : index
    %c0_23 = arith.constant 0 : index
    %49 = vector.load %arg4[%c0_22, %c0_23] : memref<64x1xf32, #tpu.memory_space<vmem>>, vector<64x1xf32>
    %50 = vector.broadcast %49 : vector<64x1xf32> to vector<64x256xf32>
    %51 = arith.addf %48, %50 : vector<64x256xf32>
    %cst_24 = arith.constant 0.000000e+00 : f32
    %52 = vector.broadcast %cst_24 : f32 to vector<64x256xf32>
    %53 = arith.maximumf %51, %52 : vector<64x256xf32>
    %c0_25 = arith.constant 0 : index
    %c0_26 = arith.constant 0 : index
    %54 = vector.load %arg5[%c0_25, %c0_26] : memref<1x64xf32, #tpu.memory_space<vmem>>, vector<1x64xf32>
    %cst_27 = arith.constant dense<0.000000e+00> : vector<1x256xf32>
    %55 = tpu.matmul %54, %53, %cst_27 {dimension_numbers = #tpu.dot_dimension_numbers<[1], [0], [0], [1], [0, 0, 1, 1], [], []>} : vector<1x64xf32>, vector<64x256xf32>, vector<1x256xf32> -> vector<1x256xf32>
    %c0_28 = arith.constant 0 : index
    %c0_29 = arith.constant 0 : index
    %56 = vector.load %arg6[%c0_28, %c0_29] : memref<1x1xf32, #tpu.memory_space<vmem>>, vector<1x1xf32>
    %57 = vector.broadcast %56 : vector<1x1xf32> to vector<1x256xf32>
    %58 = arith.addf %55, %57 : vector<1x256xf32>
    %cst_30 = arith.constant 0.000000e+00 : f32
    %59 = vector.broadcast %cst_30 : f32 to vector<1x256xf32>
    %60 = arith.subf %59, %58 : vector<1x256xf32>
    %61 = math.exp %60 : vector<1x256xf32>
    %cst_31 = arith.constant 1.000000e+00 : f32
    %62 = vector.broadcast %cst_31 : f32 to vector<1x256xf32>
    %63 = arith.addf %62, %61 : vector<1x256xf32>
    %64 = tpu.reciprocal %63 : vector<1x256xf32> -> vector<1x256xf32>
    %65 = arith.subf %0, %1 : vector<8x256xf32>
    %66 = vector.broadcast %64 : vector<1x256xf32> to vector<8x256xf32>
    %67 = arith.mulf %66, %65 : vector<8x256xf32>
    %68 = arith.addf %1, %67 : vector<8x256xf32>
    %c0_32 = arith.constant 0 : index
    %c0_33 = arith.constant 0 : index
    %69 = vector.load %arg7[%c0_32, %c0_33] : memref<64x8xf32, #tpu.memory_space<vmem>>, vector<64x8xf32>
    %cst_34 = arith.constant dense<0.000000e+00> : vector<64x256xf32>
    %70 = tpu.matmul %69, %68, %cst_34 {dimension_numbers = #tpu.dot_dimension_numbers<[1], [0], [0], [1], [0, 0, 1, 1], [], []>} : vector<64x8xf32>, vector<8x256xf32>, vector<64x256xf32> -> vector<64x256xf32>
    %c0_35 = arith.constant 0 : index
    %c0_36 = arith.constant 0 : index
    %71 = vector.load %arg8[%c0_35, %c0_36] : memref<64x1xf32, #tpu.memory_space<vmem>>, vector<64x1xf32>
    %72 = vector.broadcast %71 : vector<64x1xf32> to vector<64x256xf32>
    %73 = arith.addf %70, %72 : vector<64x256xf32>
    %cst_37 = arith.constant 0.000000e+00 : f32
    %74 = vector.broadcast %cst_37 : f32 to vector<64x256xf32>
    %75 = arith.maximumf %73, %74 : vector<64x256xf32>
    %c0_38 = arith.constant 0 : index
    %c0_39 = arith.constant 0 : index
    %76 = vector.load %arg9[%c0_38, %c0_39] : memref<8x64xf32, #tpu.memory_space<vmem>>, vector<8x64xf32>
    %cst_40 = arith.constant dense<0.000000e+00> : vector<8x256xf32>
    %77 = tpu.matmul %76, %75, %cst_40 {dimension_numbers = #tpu.dot_dimension_numbers<[1], [0], [0], [1], [0, 0, 1, 1], [], []>} : vector<8x64xf32>, vector<64x256xf32>, vector<8x256xf32> -> vector<8x256xf32>
    %c0_41 = arith.constant 0 : index
    %c0_42 = arith.constant 0 : index
    %78 = vector.load %arg10[%c0_41, %c0_42] : memref<8x1xf32, #tpu.memory_space<vmem>>, vector<8x1xf32>
    %79 = vector.broadcast %78 : vector<8x1xf32> to vector<8x256xf32>
    %80 = arith.addf %77, %79 : vector<8x256xf32>
    %c0_43 = arith.constant 0 : index
    %c0_44 = arith.constant 0 : index
    %81 = vector.load %arg11[%c0_43, %c0_44] : memref<8x256xf32, #tpu.memory_space<vmem>>, vector<8x256xf32>
    tpu.vector_store %arg11[%c0_43, %c0_44], %80 {strides = array<i32>} : memref<8x256xf32, #tpu.memory_space<vmem>>, vector<8x256xf32>,
    return
  }
  func.func @transform_0(%arg0: i32) -> (i32, i32) {
    %c0_i32 = arith.constant 0 : i32
    %c0_i32_0 = arith.constant 0 : i32
    return %c0_i32, %arg0 : i32, i32
  }
  func.func @transform_1(%arg0: i32) -> (i32, i32) {
    %c0_i32 = arith.constant 0 : i32
    %c0_i32_0 = arith.constant 0 : i32
    return %c0_i32, %arg0 : i32, i32
  }
  func.func @transform_2(%arg0: i32) -> (i32, i32) {
    %c0_i32 = arith.constant 0 : i32
    %c0_i32_0 = arith.constant 0 : i32
    %c0_i32_1 = arith.constant 0 : i32
    return %c0_i32, %c0_i32_0 : i32, i32
  }
  func.func @transform_3(%arg0: i32) -> (i32, i32) {
    %c0_i32 = arith.constant 0 : i32
    %c0_i32_0 = arith.constant 0 : i32
    %c0_i32_1 = arith.constant 0 : i32
    return %c0_i32, %c0_i32_0 : i32, i32
  }
  func.func @transform_4(%arg0: i32) -> (i32, i32) {
    %c0_i32 = arith.constant 0 : i32
    %c0_i32_0 = arith.constant 0 : i32
    %c0_i32_1 = arith.constant 0 : i32
    return %c0_i32, %c0_i32_0 : i32, i32
  }
  func.func @transform_5(%arg0: i32) -> (i32, i32) {
    %c0_i32 = arith.constant 0 : i32
    %c0_i32_0 = arith.constant 0 : i32
    %c0_i32_1 = arith.constant 0 : i32
    return %c0_i32, %c0_i32_0 : i32, i32
  }
  func.func @transform_6(%arg0: i32) -> (i32, i32) {
    %c0_i32 = arith.constant 0 : i32
    %c0_i32_0 = arith.constant 0 : i32
    %c0_i32_1 = arith.constant 0 : i32
    return %c0_i32, %c0_i32_0 : i32, i32
  }
  func.func @transform_7(%arg0: i32) -> (i32, i32) {
    %c0_i32 = arith.constant 0 : i32
    %c0_i32_0 = arith.constant 0 : i32
    %c0_i32_1 = arith.constant 0 : i32
    return %c0_i32, %c0_i32_0 : i32, i32
  }
  func.func @transform_8(%arg0: i32) -> (i32, i32) {
    %c0_i32 = arith.constant 0 : i32
    %c0_i32_0 = arith.constant 0 : i32
    %c0_i32_1 = arith.constant 0 : i32
    return %c0_i32, %c0_i32_0 : i32, i32
  }
  func.func @transform_9(%arg0: i32) -> (i32, i32) {
    %c0_i32 = arith.constant 0 : i32
    %c0_i32_0 = arith.constant 0 : i32
    %c0_i32_1 = arith.constant 0 : i32
    return %c0_i32, %c0_i32_0 : i32, i32
  }
  func.func @transform_10(%arg0: i32) -> (i32, i32) {
    %c0_i32 = arith.constant 0 : i32
    %c0_i32_0 = arith.constant 0 : i32
    return %c0_i32, %arg0 : i32, i32
  }
}

</mosaic_0001>

<llo_original>
// kernel: gated_ensembler.1
$region0: #{gated_ensembler.1}
  #allocation0 [shape = 'u32[]', space=smem, size = 0x4, offset = 0x4, fixed_abs, tag = 'smem constant byte address 0x4 - core index']
  #allocation1 [shape = 'u32[144,128]{1,0:T(1,128)}', space=vmem, size = 0x12000, scoped, tag = 'internal scratch']
  #allocation2 [shape = 'f32[18,256]{1,0:T(8,128)}', space=vmem, size = 0x6000, scoped, tag = 'scratch operand']
  #allocation3 [shape = 'f32[1,1]{1,0:T(1,128)S(1)}', space=vmem, size = 0x200, scoped, tag = 'scoped memory for gated_ensembler.1']
  %s0 = inlined_call_operand.vmem [shape: f32[8,300], index: 0, kind: input, shape index: {}]
  %s1 = inlined_call_operand.vmem [shape: f32[8,300], index: 1, kind: input, shape index: {}]
  %s2 = inlined_call_operand.vmem [shape: f32[64,18], index: 2, kind: input, shape index: {}]
  %s3 = inlined_call_operand.vmem [shape: f32[64,1], index: 3, kind: input, shape index: {}]
  %s4 = inlined_call_operand.vmem [shape: f32[1,64], index: 4, kind: input, shape index: {}]
  %s5 = inlined_call_operand.<no memory space> [shape: f32[1,1], index: 5, kind: input, shape index: {}]
  %s6 = inlined_call_operand.vmem [shape: f32[64,8], index: 6, kind: input, shape index: {}]
  %s7 = inlined_call_operand.vmem [shape: f32[64,1], index: 7, kind: input, shape index: {}]
  %s8 = inlined_call_operand.vmem [shape: f32[8,64], index: 8, kind: input, shape index: {}]
  %s9 = inlined_call_operand.vmem [shape: f32[8,1], index: 9, kind: input, shape index: {}]
  %s10 = inlined_call_operand.hbm [shape: f32[8,300], index: 10, kind: output, shape index: {}]
  %s11 = sld [smem:[#allocation0]]
  $region73: #{gated_ensembler.1} parent=0
    _
  %s13 = ssub.s32 1, %s11
  %s14 = scalar_select 0, %s13, %s11
  %v15 = vstv %s5
  %16 = vst [vmem:[#allocation3] sm:$0x1] %v15
  $region1: #{gated_ensembler.1} parent=0
    #allocation4 [shape = 'u8[16384]{0}', space=vmem, size = 0x4000, scoped, tag = 'output window, operand 0']
    #allocation5 [shape = 's32[2]{0}', space=sflag, size = 0x8, scoped, tag = 'scoped memory for gated_ensembler.1']
    %17 = vsyncpa [#allocation5], 0
    %s18 = scalar_lea.sflag [#allocation5], 1
    %19 = vsyncpa %s18, 0
    loop: start=0, step=1, limit=4
    $region2: #{gated_ensembler.1} parent=1 // loop_pre_header
      _
    $region3: #{gated_ensembler.1} parent=1 // loop_header
      %s21 = sphi 0, %s25
      %p22 = scmp.ge.s32.totalorder %s21, 4
      %s31 = sphi 0, %s33
      %s34 = sphi 0, %s31
      %s35 = sphi 0, %s34
      %s51 = sphi 0, %s35
      %s57 = sphi 0, %s59
      %s60 = sphi 0, %s57
      %s61 = sphi 0, %s60
      %s77 = sphi 0, %s61
      %s81 = sphi 0, %s81
      %s83 = sphi 0, %s81
      %s84 = sphi 0, %s83
      %s98 = sphi 0, %s84
      %s102 = sphi 0, %s102
      %s104 = sphi 0, %s102
      %s105 = sphi 0, %s104
      %s119 = sphi 0, %s105
      %s123 = sphi 0, %s123
      %s125 = sphi 0, %s123
      %s126 = sphi 0, %s125
      %s140 = sphi 0, %s126
      %s144 = sphi 0, %s144
      %s146 = sphi 0, %s144
      %s147 = sphi 0, %s146
      %s161 = sphi 0, %s147
      %s165 = sphi 0, %s165
      %s167 = sphi 0, %s165
      %s168 = sphi 0, %s167
      %s182 = sphi 0, %s168
      %s186 = sphi 0, %s186
      %s188 = sphi 0, %s186
      %s189 = sphi 0, %s188
      %s203 = sphi 0, %s189
      %s207 = sphi 0, %s207
      %s209 = sphi 0, %s207
      %s210 = sphi 0, %s209
      %s224 = sphi 0, %s210
      %s228 = sphi 0, %s228
      %s230 = sphi 0, %s228
      %s231 = sphi 0, %s230
      %s245 = sphi 0, %s231
      %s251 = sphi 0, %s253
      %s254 = sphi 0, %s251
      %s255 = sphi 0, %s254
      %s271 = sphi 0, %s255
    $region4: #{gated_ensembler.1} parent=1 // loop_header_branch
      %24 = sbr.rel (%p22) target = $region8
    $region5: #{gated_ensembler.1} parent=1 // loop_body
      %s26 = ssub.s32 %s21, 1
      %s27 = ssub.s32 %s21, 2
      %s28 = sadd.s32 %s21, 1
      %s29 = ssub.s32 %s21, %s28
      %p30 = scmp.eq.s32.totalorder %s29, 0
      %s32 = sadd.s32 %s31, 1
      %s33 = scalar_select %p30, %s31, %s32
      %p36 = pneg %p30
      %p37 = scmp.eq.s32.totalorder %s21, 1
      %p38 = por %p36, %p37
      %p39 = scmp.ne.s32.totalorder %s31, %s34
      %p40 = scmp.eq.s32.totalorder %s21, 0
      %p41 = por %p39, %p40
      %p42 = scmp.ne.s32.totalorder %s31, %s34
      %p43 = scmp.eq.s32.totalorder %s26, 1
      %p44 = por %p42, %p43
      %p45 = scmp.ne.s32.totalorder %s34, %s35
      %p46 = scmp.eq.s32.totalorder %s26, 0
      %p47 = por %p45, %p46
      %p48 = scmp.ne.s32.totalorder %s34, %s35
      %p49 = scmp.eq.s32.totalorder %s27, 1
      %p50 = por %p48, %p49
      %p52 = scmp.ne.s32.totalorder %s35, %s51
      %p53 = scmp.eq.s32.totalorder %s27, 0
      %p54 = por %p52, %p53
      %s55 = ssub.s32 %s21, %s28
      %p56 = scmp.eq.s32.totalorder %s55, 0
      %s58 = sadd.s32 %s57, 1
      %s59 = scalar_select %p56, %s57, %s58
      %p62 = pneg %p56
      %p63 = scmp.eq.s32.totalorder %s21, 1
      %p64 = por %p62, %p63
      %p65 = scmp.ne.s32.totalorder %s57, %s60
      %p66 = scmp.eq.s32.totalorder %s21, 0
      %p67 = por %p65, %p66
      %p68 = scmp.ne.s32.totalorder %s57, %s60
      %p69 = scmp.eq.s32.totalorder %s26, 1
      %p70 = por %p68, %p69
      %p71 = scmp.ne.s32.totalorder %s60, %s61
      %p72 = scmp.eq.s32.totalorder %s26, 0
      %p73 = por %p71, %p72
      %p74 = scmp.ne.s32.totalorder %s60, %s61
      %p75 = scmp.eq.s32.totalorder %s27, 1
      %p76 = por %p74, %p75
      %p78 = scmp.ne.s32.totalorder %s61, %s77
      %p79 = scmp.eq.s32.totalorder %s27, 0
      %p80 = por %p78, %p79
      %s82 = sadd.s32 %s81, 1
      %p85 = scmp.eq.s32.totalorder %s21, 1
      %p86 = scmp.ne.s32.totalorder %s81, %s83
      %p87 = scmp.eq.s32.totalorder %s21, 0
      %p88 = por %p86, %p87
      %p89 = scmp.ne.s32.totalorder %s81, %s83
      %p90 = scmp.eq.s32.totalorder %s26, 1
      %p91 = por %p89, %p90
      %p92 = scmp.ne.s32.totalorder %s83, %s84
      %p93 = scmp.eq.s32.totalorder %s26, 0
      %p94 = por %p92, %p93
      %p95 = scmp.ne.s32.totalorder %s83, %s84
      %p96 = scmp.eq.s32.totalorder %s27, 1
      %p97 = por %p95, %p96
      %p99 = scmp.ne.s32.totalorder %s84, %s98
      %p100 = scmp.eq.s32.totalorder %s27, 0
      %p101 = por %p99, %p100
      %s103 = sadd.s32 %s102, 1
      %p106 = scmp.eq.s32.totalorder %s21, 1
      %p107 = scmp.ne.s32.totalorder %s102, %s104
      %p108 = scmp.eq.s32.totalorder %s21, 0
      %p109 = por %p107, %p108
      %p110 = scmp.ne.s32.totalorder %s102, %s104
      %p111 = scmp.eq.s32.totalorder %s26, 1
      %p112 = por %p110, %p111
      %p113 = scmp.ne.s32.totalorder %s104, %s105
      %p114 = scmp.eq.s32.totalorder %s26, 0
      %p115 = por %p113, %p114
      %p116 = scmp.ne.s32.totalorder %s104, %s105
      %p117 = scmp.eq.s32.totalorder %s27, 1
      %p118 = por %p116, %p117
      %p120 = scmp.ne.s32.totalorder %s105, %s119
      %p121 = scmp.eq.s32.totalorder %s27, 0
      %p122 = por %p120, %p121
      %s124 = sadd.s32 %s123, 1
      %p127 = scmp.eq.s32.totalorder %s21, 1
      %p128 = scmp.ne.s32.totalorder %s123, %s125
      %p129 = scmp.eq.s32.totalorder %s21, 0
      %p130 = por %p128, %p129
      %p131 = scmp.ne.s32.totalorder %s123, %s125
      %p132 = scmp.eq.s32.totalorder %s26, 1
      %p133 = por %p131, %p132
      %p134 = scmp.ne.s32.totalorder %s125, %s126
      %p135 = scmp.eq.s32.totalorder %s26, 0
      %p136 = por %p134, %p135
      %p137 = scmp.ne.s32.totalorder %s125, %s126
      %p138 = scmp.eq.s32.totalorder %s27, 1
      %p139 = por %p137, %p138
      %p141 = scmp.ne.s32.totalorder %s126, %s140
      %p142 = scmp.eq.s32.totalorder %s27, 0
      %p143 = por %p141, %p142
      %s145 = sadd.s32 %s144, 1
      %p148 = scmp.eq.s32.totalorder %s21, 1
      %p149 = scmp.ne.s32.totalorder %s144, %s146
      %p150 = scmp.eq.s32.totalorder %s21, 0
      %p151 = por %p149, %p150
      %p152 = scmp.ne.s32.totalorder %s144, %s146
      %p153 = scmp.eq.s32.totalorder %s26, 1
      %p154 = por %p152, %p153
      %p155 = scmp.ne.s32.totalorder %s146, %s147
      %p156 = scmp.eq.s32.totalorder %s26, 0
      %p157 = por %p155, %p156
      %p158 = scmp.ne.s32.totalorder %s146, %s147
      %p159 = scmp.eq.s32.totalorder %s27, 1
      %p160 = por %p158, %p159
      %p162 = scmp.ne.s32.totalorder %s147, %s161
      %p163 = scmp.eq.s32.totalorder %s27, 0
      %p164 = por %p162, %p163
      %s166 = sadd.s32 %s165, 1
      %p169 = scmp.eq.s32.totalorder %s21, 1
      %p170 = scmp.ne.s32.totalorder %s165, %s167
      %p171 = scmp.eq.s32.totalorder %s21, 0
      %p172 = por %p170, %p171
      %p173 = scmp.ne.s32.totalorder %s165, %s167
      %p174 = scmp.eq.s32.totalorder %s26, 1
      %p175 = por %p173, %p174
      %p176 = scmp.ne.s32.totalorder %s167, %s168
      %p177 = scmp.eq.s32.totalorder %s26, 0
      %p178 = por %p176, %p177
      %p179 = scmp.ne.s32.totalorder %s167, %s168
      %p180 = scmp.eq.s32.totalorder %s27, 1
      %p181 = por %p179, %p180
      %p183 = scmp.ne.s32.totalorder %s168, %s182
      %p184 = scmp.eq.s32.totalorder %s27, 0
      %p185 = por %p183, %p184
      %s187 = sadd.s32 %s186, 1
      %p190 = scmp.eq.s32.totalorder %s21, 1
      %p191 = scmp.ne.s32.totalorder %s186, %s188
      %p192 = scmp.eq.s32.totalorder %s21, 0
      %p193 = por %p191, %p192
      %p194 = scmp.ne.s32.totalorder %s186, %s188
      %p195 = scmp.eq.s32.totalorder %s26, 1
      %p196 = por %p194, %p195
      %p197 = scmp.ne.s32.totalorder %s188, %s189
      %p198 = scmp.eq.s32.totalorder %s26, 0
      %p199 = por %p197, %p198
      %p200 = scmp.ne.s32.totalorder %s188, %s189
      %p201 = scmp.eq.s32.totalorder %s27, 1
      %p202 = por %p200, %p201
      %p204 = scmp.ne.s32.totalorder %s189, %s203
      %p205 = scmp.eq.s32.totalorder %s27, 0
      %p206 = por %p204, %p205
      %s208 = sadd.s32 %s207, 1
      %p211 = scmp.eq.s32.totalorder %s21, 1
      %p212 = scmp.ne.s32.totalorder %s207, %s209
      %p213 = scmp.eq.s32.totalorder %s21, 0
      %p214 = por %p212, %p213
      %p215 = scmp.ne.s32.totalorder %s207, %s209
      %p216 = scmp.eq.s32.totalorder %s26, 1
      %p217 = por %p215, %p216
      %p218 = scmp.ne.s32.totalorder %s209, %s210
      %p219 = scmp.eq.s32.totalorder %s26, 0
      %p220 = por %p218, %p219
      %p221 = scmp.ne.s32.totalorder %s209, %s210
      %p222 = scmp.eq.s32.totalorder %s27, 1
      %p223 = por %p221, %p222
      %p225 = scmp.ne.s32.totalorder %s210, %s224
      %p226 = scmp.eq.s32.totalorder %s27, 0
      %p227 = por %p225, %p226
      %s229 = sadd.s32 %s228, 1
      %p232 = scmp.eq.s32.totalorder %s21, 1
      %p233 = scmp.ne.s32.totalorder %s228, %s230
      %p234 = scmp.eq.s32.totalorder %s21, 0
      %p235 = por %p233, %p234
      %p236 = scmp.ne.s32.totalorder %s228, %s230
      %p237 = scmp.eq.s32.totalorder %s26, 1
      %p238 = por %p236, %p237
      %p239 = scmp.ne.s32.totalorder %s230, %s231
      %p240 = scmp.eq.s32.totalorder %s26, 0
      %p241 = por %p239, %p240
      %p242 = scmp.ne.s32.totalorder %s230, %s231
      %p243 = scmp.eq.s32.totalorder %s27, 1
      %p244 = por %p242, %p243
      %p246 = scmp.ne.s32.totalorder %s231, %s245
      %p247 = scmp.eq.s32.totalorder %s27, 0
      %p248 = por %p246, %p247
      %s249 = ssub.s32 %s21, %s28
      %p250 = scmp.eq.s32.totalorder %s249, 0
      %s252 = sadd.s32 %s251, 1
      %s253 = scalar_select %p250, %s251, %s252
      %p256 = pneg %p250
      %p257 = scmp.eq.s32.totalorder %s21, 1
      %p258 = por %p256, %p257
      %p259 = scmp.ne.s32.totalorder %s251, %s254
      %p260 = scmp.eq.s32.totalorder %s21, 0
      %p261 = por %p259, %p260
      %p262 = scmp.ne.s32.totalorder %s251, %s254
      %p263 = scmp.eq.s32.totalorder %s26, 1
      %p264 = por %p262, %p263
      %p265 = scmp.ne.s32.totalorder %s254, %s255
      %p266 = scmp.eq.s32.totalorder %s26, 0
      %p267 = por %p265, %p266
      %p268 = scmp.ne.s32.totalorder %s254, %s255
      %p269 = scmp.eq.s32.totalorder %s27, 1
      %p270 = por %p268, %p269
      %p272 = scmp.ne.s32.totalorder %s255, %s271
      %p273 = scmp.eq.s32.totalorder %s27, 0
      %p274 = por %p272, %p273
      %p275 = scmp.le.s32.totalorder 1, %s21
      %p276 = scmp.lt.s32.totalorder %s21, 3
      %p277 = pnand %p275, %p276
      %p278 = pneg %p277
      // Predicated region
      $region9: #{gated_ensembler.1} parent=5 // pred_check
        _
      $region10: #{gated_ensembler.1} parent=5 // pred_check_branch
        %280 = sbr.rel (%p277) target = $region12
      $region11: #{gated_ensembler.1} parent=5 // pred_region
        %s281 = ssub.s32 %s21, 1
        // Predicated region
        $region13: #{gated_ensembler.1} parent=11 // pred_check
          %p282 = pneg %p94
        $region14: #{gated_ensembler.1} parent=11 // pred_check_branch
          %284 = sbr.rel (%p282) target = $region16
        $region15: #{gated_ensembler.1} parent=11 // pred_region
          _
        $region16: #{gated_ensembler.1} parent=11 // pred_fallthru
          _
        // Predicated region
        $region17: #{gated_ensembler.1} parent=11 // pred_check
          %p285 = pneg %p115
        $region18: #{gated_ensembler.1} parent=11 // pred_check_branch
          %287 = sbr.rel (%p285) target = $region20
        $region19: #{gated_ensembler.1} parent=11 // pred_region
          _
        $region20: #{gated_ensembler.1} parent=11 // pred_fallthru
          _
        // Predicated region
        $region21: #{gated_ensembler.1} parent=11 // pred_check
          %p288 = pneg %p136
        $region22: #{gated_ensembler.1} parent=11 // pred_check_branch
          %290 = sbr.rel (%p288) target = $region24
        $region23: #{gated_ensembler.1} parent=11 // pred_region
          _
        $region24: #{gated_ensembler.1} parent=11 // pred_fallthru
          _
        // Predicated region
        $region25: #{gated_ensembler.1} parent=11 // pred_check
          %p291 = pneg %p157
        $region26: #{gated_ensembler.1} parent=11 // pred_check_branch
          %293 = sbr.rel (%p291) target = $region28
        $region27: #{gated_ensembler.1} parent=11 // pred_region
          _
        $region28: #{gated_ensembler.1} parent=11 // pred_fallthru
          _
        // Predicated region
        $region29: #{gated_ensembler.1} parent=11 // pred_check
          %p294 = pneg %p178
        $region30: #{gated_ensembler.1} parent=11 // pred_check_branch
          %296 = sbr.rel (%p294) target = $region32
        $region31: #{gated_ensembler.1} parent=11 // pred_region
          _
        $region32: #{gated_ensembler.1} parent=11 // pred_fallthru
          _
        // Predicated region
        $region33: #{gated_ensembler.1} parent=11 // pred_check
          %p297 = pneg %p199
        $region34: #{gated_ensembler.1} parent=11 // pred_check_branch
          %299 = sbr.rel (%p297) target = $region36
        $region35: #{gated_ensembler.1} parent=11 // pred_region
          _
        $region36: #{gated_ensembler.1} parent=11 // pred_fallthru
          _
        // Predicated region
        $region37: #{gated_ensembler.1} parent=11 // pred_check
          %p300 = pneg %p220
        $region38: #{gated_ensembler.1} parent=11 // pred_check_branch
          %302 = sbr.rel (%p300) target = $region40
        $region39: #{gated_ensembler.1} parent=11 // pred_region
          _
        $region40: #{gated_ensembler.1} parent=11 // pred_fallthru
          _
        // Predicated region
        $region41: #{gated_ensembler.1} parent=11 // pred_check
          %p303 = pneg %p241
        $region42: #{gated_ensembler.1} parent=11 // pred_check_branch
          %305 = sbr.rel (%p303) target = $region44
        $region43: #{gated_ensembler.1} parent=11 // pred_region
          _
        $region44: #{gated_ensembler.1} parent=11 // pred_fallthru
          _
      $region12: #{gated_ensembler.1} parent=5 // pred_fallthru
        _
      %p306 = scmp.lt.s32.totalorder %s21, 2
      // Predicated region
      $region45: #{gated_ensembler.1} parent=5 // pred_check
        %p307 = pneg %p306
      $region46: #{gated_ensembler.1} parent=5 // pred_check_branch
        %309 = sbr.rel (%p307) target = $region48
      $region47: #{gated_ensembler.1} parent=5 // pred_region
        // Predicated region
        $region49: #{gated_ensembler.1} parent=47 // pred_check
          %p310 = pneg %p41
        $region50: #{gated_ensembler.1} parent=47 // pred_check_branch
          %312 = sbr.rel (%p310) target = $region52
        $region51: #{gated_ensembler.1} parent=47 // pred_region
          %s313 = smul.u32 2, %s21
          %s314 = ssub.s32 3, %s313
          %p315 = scmp.lt.s32.totalorder %s314, 2
          %s316 = scalar_select %p315, %s314, 2
          %s317 = smul.u32 128, %s316
          %p318 = scmp.lt.s32.totalorder %s313, 2
          %s319 = scalar_select %p318, %s313, 2
          %s320 = smul.addr %s319, 8
          %s321 = scalar_lea.vmem %s0, %s320
          %s322 = smul.u32 2, %s21
          %s323 = ssub.s32 3, %s322
          %p324 = scmp.lt.s32.totalorder %s323, 2
          %s325 = scalar_select %p324, %s323, 2
          %s326 = smul.u32 128, %s325
        $region52: #{gated_ensembler.1} parent=47 // pred_fallthru
          _
        // Predicated region
        $region53: #{gated_ensembler.1} parent=47 // pred_check
          %p327 = pneg %p67
        $region54: #{gated_ensembler.1} parent=47 // pred_check_branch
          %329 = sbr.rel (%p327) target = $region56
        $region55: #{gated_ensembler.1} parent=47 // pred_region
          %s330 = smul.u32 2, %s21
          %s331 = ssub.s32 3, %s330
          %p332 = scmp.lt.s32.totalorder %s331, 2
          %s333 = scalar_select %p332, %s331, 2
          %s334 = smul.u32 128, %s333
          %p335 = scmp.lt.s32.totalorder %s330, 2
          %s336 = scalar_select %p335, %s330, 2
          %s337 = smul.addr %s336, 8
          %s338 = scalar_lea.vmem %s1, %s337
          %s339 = smul.u32 2, %s21
          %s340 = ssub.s32 3, %s339
          %p341 = scmp.lt.s32.totalorder %s340, 2
          %s342 = scalar_select %p341, %s340, 2
          %s343 = smul.u32 128, %s342
        $region56: #{gated_ensembler.1} parent=47 // pred_fallthru
          _
      $region48: #{gated_ensembler.1} parent=5 // pred_fallthru
        _
      %p344 = scmp.le.s32.totalorder 1, %s21
      %p345 = scmp.lt.s32.totalorder %s21, 3
      %p346 = pnand %p344, %p345
      %p347 = pneg %p346
      // Predicated region
      $region57: #{gated_ensembler.1} parent=5 // pred_check
        _
      $region58: #{gated_ensembler.1} parent=5 // pred_check_branch
        %349 = sbr.rel (%p346) target = $region60
      $region59: #{gated_ensembler.1} parent=5 // pred_region
        %s350 = ssub.s32 %s21, 1
        %s351 = smul.u32 2, %s26
        %s352 = ssub.s32 3, %s351
        %p353 = scmp.lt.s32.totalorder %s352, 2
        %s354 = scalar_select %p353, %s352, 2
        %s355 = smul.u32 128, %s354
        %p356 = scmp.lt.s32.totalorder %s351, 2
        %s357 = scalar_select %p356, %s351, 2
        %s358 = smul.addr %s357, 8
        %s359 = scalar_lea.vmem %s0, %s358
        %p360 = pneg %p47
        %p361 = pneg %p44
        %s362 = smul.u32 2, %s26
        %s363 = ssub.s32 3, %s362
        %p364 = scmp.lt.s32.totalorder %s363, 2
        %s365 = scalar_select %p364, %s363, 2
        %s366 = smul.u32 128, %s365
        %p367 = scmp.lt.s32.totalorder %s362, 2
        %s368 = scalar_select %p367, %s362, 2
        %s369 = smul.addr %s368, 8
        %s370 = scalar_lea.vmem %s1, %s369
        %p371 = pneg %p73
        %p372 = pneg %p70
        %p373 = pneg %p94
        %p374 = pneg %p91
        %p375 = pneg %p115
        %p376 = pneg %p112
        %p377 = pneg %p136
        %p378 = pneg %p133
        %p379 = pneg %p157
        %p380 = pneg %p154
        %p381 = pneg %p178
        %p382 = pneg %p175
        %p383 = pneg %p199
        %p384 = pneg %p196
        %p385 = pneg %p220
        %p386 = pneg %p217
        %p387 = pneg %p241
        %p388 = pneg %p238
        %p389 = pneg %p267
        %p390 = pneg %p264
        %s391 = sand.u32 %s254, 1
        %s392 = scalar_lea.sflag [#allocation5], %s391
        %s393 = sand.u32 %s254, 1
        %s394 = smul.addr %s393, 16
        %s395 = scalar_lea.vmem [#allocation4], %s394
        %s396 = smul.u32 2, %s26
        %s397 = ssub.s32 3, %s396
        %p398 = scmp.lt.s32.totalorder %s397, 2
        %s399 = scalar_select %p398, %s397, 2
        %s400 = smul.u32 128, %s399
        %p401 = scmp.lt.s32.totalorder %s396, 2
        %s402 = scalar_select %p401, %s396, 2
        %s403 = smul.addr %s402, 8
        %s404 = scalar_lea.vmem %s0, %s403
        %s405 = smul.u32 2, %s26
        %s406 = ssub.s32 3, %s405
        %p407 = scmp.lt.s32.totalorder %s406, 2
        %s408 = scalar_select %p407, %s406, 2
        %s409 = smul.u32 128, %s408
        %s410 = smul.u32 2, %s26
        %s411 = ssub.s32 3, %s410
        %p412 = scmp.lt.s32.totalorder %s411, 2
        %s413 = scalar_select %p412, %s411, 2
        %s414 = smul.u32 128, %s413
        %p415 = scmp.lt.s32.totalorder %s410, 2
        %s416 = scalar_select %p415, %s410, 2
        %s417 = smul.addr %s416, 8
        %s418 = scalar_lea.vmem %s1, %s417
        %s419 = smul.u32 2, %s26
        %s420 = ssub.s32 3, %s419
        %p421 = scmp.lt.s32.totalorder %s420, 2
        %s422 = scalar_select %p421, %s420, 2
        %s423 = smul.u32 128, %s422
        %s424 = smul.u32 2, %s26
        %s425 = ssub.s32 3, %s424
        %p426 = scmp.lt.s32.totalorder %s425, 2
        %s427 = scalar_select %p426, %s425, 2
        %s428 = smul.u32 128, %s427
        %v429 = vld [vmem:[%s404] sm:$0xff]
        %v430 = vld [vmem:[%s404 + $0x8] sm:$0xff]
        %v431 = vld [vmem:[%s418] sm:$0xff]
        %v432 = vld [vmem:[%s418 + $0x8] sm:$0xff]
        %v433 = vrot.slane %v429, 4
        %v434 = vmax.f32 %v429, %v433
        %v435 = vrot.slane %v434, 2
        %v436 = vmax.f32 %v434, %v435
        %v437 = vrot.slane %v436, 1
        %v438 = vmax.f32 %v436, %v437
        %v439 = vrot.slane %v430, 4
        %v440 = vmax.f32 %v430, %v439
        %v441 = vrot.slane %v440, 2
        %v442 = vmax.f32 %v440, %v441
        %v443 = vrot.slane %v442, 1
        %v444 = vmax.f32 %v442, %v443
        %v445 = vsub.f32 %v429, %v438
        %v446 = vsub.f32 %v430, %v444
        %v447 = vmul.f32 %v445, 1.442695
        %v448 = vpow.pop %v447
        %v449 = vmul.f32 %v446, 1.442695
        %v450 = vpow.pop %v449
        %v451 = vrot.slane %v448, 4
        %v452 = vadd.f32 %v448, %v451
        %v453 = vrot.slane %v452, 2
        %v454 = vadd.f32 %v452, %v453
        %v455 = vrot.slane %v454, 1
        %v456 = vadd.f32 %v454, %v455
        %v457 = vrot.slane %v450, 4
        %v458 = vadd.f32 %v450, %v457
        %v459 = vrot.slane %v458, 2
        %v460 = vadd.f32 %v458, %v459
        %v461 = vrot.slane %v460, 1
        %v462 = vadd.f32 %v460, %v461
        %v463 = vrcp.pop %v456
        %v464 = vrcp.pop %v462
        %v465 = vmul.f32 %v448, %v463
        %v466 = vmul.f32 %v450, %v464
        %v467 = vlog2.pop %v456
        %v468 = vmul.f32 %v467, 0.6931472
        %v469 = vlog2.pop %v462
        %v470 = vmul.f32 %v469, 0.6931472
        %v471 = vsub.f32 %v445, %v468
        %v472 = vsub.f32 %v446, %v470
        %v473 = vmax.f32 %v471, -11.512925
        %v474 = vmax.f32 %v472, -11.512925
        %v475 = vmul.f32 %v465, %v473
        %v476 = vmul.f32 %v466, %v474
        %v477 = vrot.slane %v475, 4
        %v478 = vadd.f32 %v475, %v477
        %v479 = vrot.slane %v478, 2
        %v480 = vadd.f32 %v478, %v479
        %v481 = vrot.slane %v480, 1
        %v482 = vadd.f32 %v480, %v481
        %v483 = vrot.slane %v476, 4
        %v484 = vadd.f32 %v476, %v483
        %v485 = vrot.slane %v484, 2
        %v486 = vadd.f32 %v484, %v485
        %v487 = vrot.slane %v486, 1
        %v488 = vadd.f32 %v486, %v487
        %v489 = vsub.f32 0.0, %v482
        %v490 = vsub.f32 0.0, %v488
        %491 = vst [vmem:[#allocation2] sm:$0xff] %v465
        %492 = vst [vmem:[#allocation2 + $0x8] sm:$0xff] %v466
        %v495 = vcombine.low %v489, %v490
        %v497 = vunpack.c.l.s4 1966171168
        %v498 = vunpack.c.0.s8 %v497
        %v499 = vlaneseq
        %v500 = vshrl.u32 %v499, 7
        %v501 = vsub.s32 %v498, %v500
        %v502 = vrot.slane %v495, %v501
        %v504 = vunpack.c.l.s4 1966171168
        %v505 = vunpack.c.0.s8 %v504
        %v506 = vlaneseq
        %v507 = vshrl.u32 %v506, 7
        %v508 = vsub.s32 %v505, %v507
        %v509 = vrot.slane %v502, %v508
        %v511 = vlaneseq
        %vm512 = vcmp.ge.s32.totalorder %v511, 0
        %vm513 = vcmp.lt.s32.totalorder %v511, 256
        %vm514 = vmand %vm512, %vm513
        %s515 = scalar_lea.vmem [#allocation2], 32
        %516 = vst.msk [vmem:[%s515] ss:$8 sm:$0x3] %vm514, %v509
        %517 = vst.msk [vmem:[%s515] ss:$8 sm:$0x0] %vm514, %v509
        %v518 = vrot.slane %v431, 4
        %v519 = vmax.f32 %v431, %v518
        %v520 = vrot.slane %v519, 2
        %v521 = vmax.f32 %v519, %v520
        %v522 = vrot.slane %v521, 1
        %v523 = vmax.f32 %v521, %v522
        %v524 = vrot.slane %v432, 4
        %v525 = vmax.f32 %v432, %v524
        %v526 = vrot.slane %v525, 2
        %v527 = vmax.f32 %v525, %v526
        %v528 = vrot.slane %v527, 1
        %v529 = vmax.f32 %v527, %v528
        %v530 = vsub.f32 %v431, %v523
        %v531 = vsub.f32 %v432, %v529
        %v532 = vmul.f32 %v530, 1.442695
        %v533 = vpow.pop %v532
        %v534 = vmul.f32 %v531, 1.442695
        %v535 = vpow.pop %v534
        %v536 = vrot.slane %v533, 4
        %v537 = vadd.f32 %v533, %v536
        %v538 = vrot.slane %v537, 2
        %v539 = vadd.f32 %v537, %v538
        %v540 = vrot.slane %v539, 1
        %v541 = vadd.f32 %v539, %v540
        %v542 = vrot.slane %v535, 4
        %v543 = vadd.f32 %v535, %v542
        %v544 = vrot.slane %v543, 2
        %v545 = vadd.f32 %v543, %v544
        %v546 = vrot.slane %v545, 1
        %v547 = vadd.f32 %v545, %v546
        %v548 = vrcp.pop %v541
        %v549 = vrcp.pop %v547
        %v550 = vmul.f32 %v533, %v548
        %v551 = vmul.f32 %v535, %v549
        %v552 = vlog2.pop %v541
        %v553 = vmul.f32 %v552, 0.6931472
        %v554 = vlog2.pop %v547
        %v555 = vmul.f32 %v554, 0.6931472
        %v556 = vsub.f32 %v530, %v553
        %v557 = vsub.f32 %v531, %v555
        %v558 = vmax.f32 %v556, -11.512925
        %v559 = vmax.f32 %v557, -11.512925
        %v560 = vmul.f32 %v550, %v558
        %v561 = vmul.f32 %v551, %v559
        %v562 = vrot.slane %v560, 4
        %v563 = vadd.f32 %v560, %v562
        %v564 = vrot.slane %v563, 2
        %v565 = vadd.f32 %v563, %v564
        %v566 = vrot.slane %v565, 1
        %v567 = vadd.f32 %v565, %v566
        %v568 = vrot.slane %v561, 4
        %v569 = vadd.f32 %v561, %v568
        %v570 = vrot.slane %v569, 2
        %v571 = vadd.f32 %v569, %v570
        %v572 = vrot.slane %v571, 1
        %v573 = vadd.f32 %v571, %v572
        %v574 = vsub.f32 0.0, %v567
        %v575 = vsub.f32 0.0, %v573
        %576 = vst [vmem:[#allocation2 + $0x10] sm:$0xff] %v550
        %577 = vst [vmem:[#allocation2 + $0x18] sm:$0xff] %v551
        %v580 = vcombine.low %v574, %v575
        %v582 = vunpack.c.l.s4 1966171168
        %v583 = vunpack.c.0.s8 %v582
        %v584 = vlaneseq
        %v585 = vshrl.u32 %v584, 7
        %v586 = vsub.s32 %v583, %v585
        %v587 = vrot.slane %v580, %v586
        %v589 = vunpack.c.l.s4 1966171168
        %v590 = vunpack.c.0.s8 %v589
        %v591 = vlaneseq
        %v592 = vshrl.u32 %v591, 7
        %v593 = vsub.s32 %v590, %v592
        %v594 = vrot.slane %v587, %v593
        %s596 = scalar_lea.vmem [#allocation2], 33
        %597 = vst.msk [vmem:[%s596] ss:$8 sm:$0x3] %vm514, %v594
        %598 = vst.msk [vmem:[%s596] ss:$8 sm:$0x0] %vm514, %v594
        %v599 = vld [vmem:[%s2] sm:$0xff]
        %v600 = vld [vmem:[%s2 + $0x8] sm:$0xff]
        %v601 = vld [vmem:[%s2 + $0x10] sm:$0xff]
        %v602 = vld [vmem:[%s2 + $0x18] sm:$0xff]
        %v603 = vld [vmem:[%s2 + $0x20] sm:$0xff]
        %v604 = vld [vmem:[%s2 + $0x28] sm:$0xff]
        %v605 = vld [vmem:[%s2 + $0x30] sm:$0xff]
        %v606 = vld [vmem:[%s2 + $0x38] sm:$0xff]
        %v607 = vld [vmem:[#allocation2] sm:$0xff]
        %v608 = vld [vmem:[#allocation2 + $0x8] sm:$0xff]
        %v609 = vld [vmem:[#allocation2 + $0x10] sm:$0xff]
        %v610 = vld [vmem:[#allocation2 + $0x18] sm:$0xff]
        %v611 = vld [vmem:[#allocation2 + $0x20] sm:$0x3]
        %v612 = vld [vmem:[#allocation2 + $0x28] sm:$0x3]
        %v613 = vld [vmem:[%s3] sm:$0xff]
        %v614 = vld [vmem:[%s3 + $0x8] sm:$0xff]
        %v615 = vld [vmem:[%s3 + $0x10] sm:$0xff]
        %v616 = vld [vmem:[%s3 + $0x18] sm:$0xff]
        %v617 = vld [vmem:[%s3 + $0x20] sm:$0xff]
        %v618 = vld [vmem:[%s3 + $0x28] sm:$0xff]
        %v619 = vld [vmem:[%s3 + $0x30] sm:$0xff]
        %v620 = vld [vmem:[%s3 + $0x38] sm:$0xff]
        %622 = vset.pattern.permute.xlu0 0
        %623 = vperm.xlu0 %622, %v613
        %v624 = vpop.permute.xlu0 %623
        %627 = vset.pattern.permute.xlu0 0
        %628 = vperm.xlu0 %627, %v614
        %v629 = vpop.permute.xlu0 %628
        %632 = vset.pattern.permute.xlu0 0
        %633 = vperm.xlu0 %632, %v615
        %v634 = vpop.permute.xlu0 %633
        %637 = vset.pattern.permute.xlu0 0
        %638 = vperm.xlu0 %637, %v616
        %v639 = vpop.permute.xlu0 %638
        %642 = vset.pattern.permute.xlu0 0
        %643 = vperm.xlu0 %642, %v617
        %v644 = vpop.permute.xlu0 %643
        %647 = vset.pattern.permute.xlu0 0
        %648 = vperm.xlu0 %647, %v618
        %v649 = vpop.permute.xlu0 %648
        %652 = vset.pattern.permute.xlu0 0
        %653 = vperm.xlu0 %652, %v619
        %v654 = vpop.permute.xlu0 %653
        %657 = vset.pattern.permute.xlu0 0
        %658 = vperm.xlu0 %657, %v620
        %v659 = vpop.permute.xlu0 %658
        %vm661 = vcmask 146432
        %v663 = vsel %vm661, %v599, 0
        %v666 = vsel %vm661, %v600, 0
        %v669 = vsel %vm661, %v601, 0
        %v672 = vsel %vm661, %v602, 0
        %v675 = vsel %vm661, %v603, 0
        %v678 = vsel %vm661, %v604, 0
        %v681 = vsel %vm661, %v605, 0
        %v684 = vsel %vm661, %v606, 0
        %vm686 = vcmask 1041408
        %v688 = vsel %vm686, %v611, 0
        %v691 = vsel %vm686, %v612, 0
        %693 = vmatprep.subr.mxu0 %v608
        %694 = vmatpush1.msra.mxu0 %v607
        %695 = vmatprep.subr.mxu0 %v610
        %696 = vmatpush1.msra.mxu0 %v609
        %697 = vmatprep.subr.mxu0 %v691
        %698 = vmatpush1.msra.mxu0 %v688
        %699 = vmatprep.subr.mxu0 0.0
        %700 = vmatpush1.msra.mxu0 0.0
        %701 = vmatprep.subr.mxu0 0.0
        %702 = vmatpush1.msra.mxu0 0.0
        %703 = vmatprep.subr.mxu0 0.0
        %704 = vmatpush1.msra.mxu0 0.0
        %705 = vmatprep.subr.mxu0 0.0
        %706 = vmatpush1.msra.mxu0 0.0
        %707 = vmatprep.subr.mxu0 0.0
        %708 = vmatpush1.msra.mxu0 0.0
        %709 = vmatprep.subr.mxu0 0.0
        %710 = vmatpush1.msra.mxu0 0.0
        %711 = vmatprep.subr.mxu0 0.0
        %712 = vmatpush1.msra.mxu0 0.0
        %713 = vmatprep.subr.mxu0 0.0
        %714 = vmatpush1.msra.mxu0 0.0
        %715 = vmatprep.subr.mxu0 0.0
        %716 = vmatpush1.msra.mxu0 0.0
        %717 = vmatprep.subr.mxu0 0.0
        %718 = vmatpush1.msra.mxu0 0.0
        %719 = vmatprep.subr.mxu0 0.0
        %720 = vmatpush1.msra.mxu0 0.0
        %721 = vmatprep.subr.mxu0 0.0
        %722 = vmatpush1.msra.mxu0 0.0
        %723 = vmatprep.subr.mxu0 0.0
        %724 = vmatpush1.msra.mxu0 0.0
        %725 = vmatprep.subr.mxu0 0.0
        %726 = vmatpush1.msra.mxu0 0.0
        %727 = vmatprep.subr.mxu0 0.0
        %728 = vmatpush1.msra.mxu0 0.0
        %729 = vmatprep.subr.mxu0 0.0
        %730 = vmatpush1.msra.mxu0 0.0
        %731 = vmatprep.subr.mxu0 0.0
        %732 = vmatpush1.msra.mxu0 0.0
        %733 = vmatprep.subr.mxu0 0.0
        %734 = vmatpush1.msra.mxu0 0.0
        %735 = vmatprep.subr.mxu0 0.0
        %736 = vmatpush1.msra.mxu0 0.0
        %737 = vmatprep.subr.mxu0 0.0
        %738 = vmatpush1.msra.mxu0 0.0
        %739 = vmatprep.subr.mxu0 0.0
        %740 = vmatpush1.msra.mxu0 0.0
        %741 = vmatprep.subr.mxu0 0.0
        %742 = vmatpush1.msra.mxu0 0.0
        %743 = vmatprep.subr.mxu0 0.0
        %744 = vmatpush1.msra.mxu0 0.0
        %745 = vmatprep.subr.mxu0 0.0
        %746 = vmatpush1.msra.mxu0 0.0
        %747 = vmatprep.subr.mxu0 0.0
        %748 = vmatpush1.msra.mxu0 0.0
        %749 = vmatprep.subr.mxu0 0.0
        %750 = vmatpush1.msra.mxu0 0.0
        %751 = vmatprep.subr.mxu0 0.0
        %752 = vmatpush1.msra.mxu0 0.0
        %753 = vmatprep.subr.mxu0 0.0
        %754 = vmatpush1.msra.mxu0 0.0
        %755 = vmatprep.subr.mxu0 0.0
        %756 = vmatpush1.msra.mxu0 0.0
        %757 = vmatprep.mubr.f32.mxu0 0.0
        %758 = vmatmul.mubr.f32.gmra.mrb[0].mxu0 %v663
        %v759 = vpop.f32.mrb[0].mxu0
        %v760 = vadd.f32 %v624, %v759
        %v761 = vpop.f32.mrb[0].mxu0
        %v762 = vadd.f32 %v624, %v761
        %763 = vmatprep.mubr.f32.mxu0 0.0
        %764 = vmatmul.mubr.f32.gmra.mrb[0].mxu0 %v666
        %v765 = vpop.f32.mrb[0].mxu0
        %v766 = vadd.f32 %v629, %v765
        %v767 = vpop.f32.mrb[0].mxu0
        %v768 = vadd.f32 %v629, %v767
        %769 = vmatprep.mubr.f32.mxu0 0.0
        %770 = vmatmul.mubr.f32.gmra.mrb[0].mxu0 %v669
        %v771 = vpop.f32.mrb[0].mxu0
        %v772 = vadd.f32 %v634, %v771
        %v773 = vpop.f32.mrb[0].mxu0
        %v774 = vadd.f32 %v634, %v773
        %775 = vmatprep.mubr.f32.mxu0 0.0
        %776 = vmatmul.mubr.f32.gmra.mrb[0].mxu0 %v672
        %v777 = vpop.f32.mrb[0].mxu0
        %v778 = vadd.f32 %v639, %v777
        %v779 = vpop.f32.mrb[0].mxu0
        %v780 = vadd.f32 %v639, %v779
        %781 = vmatprep.mubr.f32.mxu0 0.0
        %782 = vmatmul.mubr.f32.gmra.mrb[0].mxu0 %v675
        %v783 = vpop.f32.mrb[0].mxu0
        %v784 = vadd.f32 %v644, %v783
        %v785 = vpop.f32.mrb[0].mxu0
        %v786 = vadd.f32 %v644, %v785
        %787 = vmatprep.mubr.f32.mxu0 0.0
        %788 = vmatmul.mubr.f32.gmra.mrb[0].mxu0 %v678
        %v789 = vpop.f32.mrb[0].mxu0
        %v790 = vadd.f32 %v649, %v789
        %v791 = vpop.f32.mrb[0].mxu0
        %v792 = vadd.f32 %v649, %v791
        %793 = vmatprep.mubr.f32.mxu0 0.0
        %794 = vmatmul.mubr.f32.gmra.mrb[0].mxu0 %v681
        %v795 = vpop.f32.mrb[0].mxu0
        %v796 = vadd.f32 %v654, %v795
        %v797 = vpop.f32.mrb[0].mxu0
        %v798 = vadd.f32 %v654, %v797
        %799 = vmatprep.mubr.f32.mxu0 0.0
        %800 = vmatmul.mubr.f32.gmra.mrb[0].mxu0 %v684
        %v801 = vpop.f32.mrb[0].mxu0
        %v802 = vadd.f32 %v659, %v801
        %v803 = vpop.f32.mrb[0].mxu0
        %v804 = vadd.f32 %v659, %v803
        %805 = vdwg.mxu0
        %v806 = vmax.f32 %v760, 0.0
        %v807 = vmax.f32 %v762, 0.0
        %v808 = vmax.f32 %v766, 0.0
        %v809 = vmax.f32 %v768, 0.0
        %v810 = vmax.f32 %v772, 0.0
        %v811 = vmax.f32 %v774, 0.0
        %v812 = vmax.f32 %v778, 0.0
        %v813 = vmax.f32 %v780, 0.0
        %v814 = vmax.f32 %v784, 0.0
        %v815 = vmax.f32 %v786, 0.0
        %v816 = vmax.f32 %v790, 0.0
        %v817 = vmax.f32 %v792, 0.0
        %v818 = vmax.f32 %v796, 0.0
        %v819 = vmax.f32 %v798, 0.0
        %v820 = vmax.f32 %v802, 0.0
        %v821 = vmax.f32 %v804, 0.0
        %v822 = vld [vmem:[%s4] sm:$0x1]
        %v823 = vld [vmem:[#allocation3] sm:$0x1]
        %825 = vset.pattern.permute.xlu0 0
        %826 = vperm.xlu0 %825, %v823
        %v827 = vpop.permute.xlu0 %826
        %v829 = vlaneseq
        %v830 = vshrl.u32 %v829, 7
        %v831 = vsub.s32 0, %v830
        %v832 = vrot.slane %v827, %v831
        %vm833 = vcmask 523264
        %v835 = vsel %vm833, %v822, 0
        %837 = vmatprep.subr.mxu0 %v807
        %838 = vmatpush1.msra.mxu0 %v806
        %839 = vmatprep.subr.mxu0 %v809
        %840 = vmatpush1.msra.mxu0 %v808
        %841 = vmatprep.subr.mxu0 %v811
        %842 = vmatpush1.msra.mxu0 %v810
        %843 = vmatprep.subr.mxu0 %v813
        %844 = vmatpush1.msra.mxu0 %v812
        %845 = vmatprep.subr.mxu0 %v815
        %846 = vmatpush1.msra.mxu0 %v814
        %847 = vmatprep.subr.mxu0 %v817
        %848 = vmatpush1.msra.mxu0 %v816
        %849 = vmatprep.subr.mxu0 %v819
        %850 = vmatpush1.msra.mxu0 %v818
        %851 = vmatprep.subr.mxu0 %v821
        %852 = vmatpush1.msra.mxu0 %v820
        %853 = vmatprep.subr.mxu0 0.0
        %854 = vmatpush1.msra.mxu0 0.0
        %855 = vmatprep.subr.mxu0 0.0
        %856 = vmatpush1.msra.mxu0 0.0
        %857 = vmatprep.subr.mxu0 0.0
        %858 = vmatpush1.msra.mxu0 0.0
        %859 = vmatprep.subr.mxu0 0.0
        %860 = vmatpush1.msra.mxu0 0.0
        %861 = vmatprep.subr.mxu0 0.0
        %862 = vmatpush1.msra.mxu0 0.0
        %863 = vmatprep.subr.mxu0 0.0
        %864 = vmatpush1.msra.mxu0 0.0
        %865 = vmatprep.subr.mxu0 0.0
        %866 = vmatpush1.msra.mxu0 0.0
        %867 = vmatprep.subr.mxu0 0.0
        %868 = vmatpush1.msra.mxu0 0.0
        %869 = vmatprep.subr.mxu0 0.0
        %870 = vmatpush1.msra.mxu0 0.0
        %871 = vmatprep.subr.mxu0 0.0
        %872 = vmatpush1.msra.mxu0 0.0
        %873 = vmatprep.subr.mxu0 0.0
        %874 = vmatpush1.msra.mxu0 0.0
        %875 = vmatprep.subr.mxu0 0.0
        %876 = vmatpush1.msra.mxu0 0.0
        %877 = vmatprep.subr.mxu0 0.0
        %878 = vmatpush1.msra.mxu0 0.0
        %879 = vmatprep.subr.mxu0 0.0
        %880 = vmatpush1.msra.mxu0 0.0
        %881 = vmatprep.subr.mxu0 0.0
        %882 = vmatpush1.msra.mxu0 0.0
        %883 = vmatprep.subr.mxu0 0.0
        %884 = vmatpush1.msra.mxu0 0.0
        %885 = vmatprep.subr.mxu0 0.0
        %886 = vmatpush1.msra.mxu0 0.0
        %887 = vmatprep.subr.mxu0 0.0
        %888 = vmatpush1.msra.mxu0 0.0
        %889 = vmatprep.subr.mxu0 0.0
        %890 = vmatpush1.msra.mxu0 0.0
        %891 = vmatprep.subr.mxu0 0.0
        %892 = vmatpush1.msra.mxu0 0.0
        %893 = vmatprep.subr.mxu0 0.0
        %894 = vmatpush1.msra.mxu0 0.0
        %895 = vmatprep.subr.mxu0 0.0
        %896 = vmatpush1.msra.mxu0 0.0
        %897 = vmatprep.subr.mxu0 0.0
        %898 = vmatpush1.msra.mxu0 0.0
        %899 = vmatprep.subr.mxu0 0.0
        %900 = vmatpush1.msra.mxu0 0.0
        %901 = vmatprep.mubr.f32.mxu0 0.0
        %902 = vmatmul.mubr.f32.gmra.mrb[0].mxu0 %v835
        %v903 = vpop.f32.mrb[0].mxu0
        %v904 = vadd.f32 %v832, %v903
        %v905 = vpop.f32.mrb[0].mxu0
        %v906 = vadd.f32 %v832, %v905
        %907 = vdwg.mxu0
        %v908 = vsub.f32 0.0, %v904
        %v909 = vsub.f32 0.0, %v906
        %v910 = vmul.f32 %v908, 1.442695
        %v911 = vpow.pop %v910
        %v912 = vmul.f32 %v909, 1.442695
        %v913 = vpow.pop %v912
        %v914 = vadd.f32 %v911, 1.0
        %v915 = vadd.f32 %v913, 1.0
        %v916 = vrcp.pop %v914
        %v917 = vrcp.pop %v915
        %v918 = vsub.f32 %v429, %v431
        %v919 = vsub.f32 %v430, %v432
        %v920 = vlaneseq
        %v921 = vshrl.u32 %v920, 7
        %v922 = vsub.s32 0, %v921
        %v923 = vrot.slane %v916, %v922
        %v924 = vlaneseq
        %v925 = vshrl.u32 %v924, 7
        %v926 = vsub.s32 0, %v925
        %v927 = vrot.slane %v917, %v926
        %v928 = vmul.f32 %v923, %v918
        %v929 = vmul.f32 %v927, %v919
        %v930 = vadd.f32 %v431, %v928
        %v931 = vadd.f32 %v432, %v929
        %v932 = vld [vmem:[%s6] sm:$0xff]
        %v933 = vld [vmem:[%s6 + $0x8] sm:$0xff]
        %v934 = vld [vmem:[%s6 + $0x10] sm:$0xff]
        %v935 = vld [vmem:[%s6 + $0x18] sm:$0xff]
        %v936 = vld [vmem:[%s6 + $0x20] sm:$0xff]
        %v937 = vld [vmem:[%s6 + $0x28] sm:$0xff]
        %v938 = vld [vmem:[%s6 + $0x30] sm:$0xff]
        %v939 = vld [vmem:[%s6 + $0x38] sm:$0xff]
        %v940 = vld [vmem:[%s7] sm:$0xff]
        %v941 = vld [vmem:[%s7 + $0x8] sm:$0xff]
        %v942 = vld [vmem:[%s7 + $0x10] sm:$0xff]
        %v943 = vld [vmem:[%s7 + $0x18] sm:$0xff]
        %v944 = vld [vmem:[%s7 + $0x20] sm:$0xff]
        %v945 = vld [vmem:[%s7 + $0x28] sm:$0xff]
        %v946 = vld [vmem:[%s7 + $0x30] sm:$0xff]
        %v947 = vld [vmem:[%s7 + $0x38] sm:$0xff]
        %949 = vset.pattern.permute.xlu0 0
        %950 = vperm.xlu0 %949, %v940
        %v951 = vpop.permute.xlu0 %950
        %954 = vset.pattern.permute.xlu0 0
        %955 = vperm.xlu0 %954, %v941
        %v956 = vpop.permute.xlu0 %955
        %959 = vset.pattern.permute.xlu0 0
        %960 = vperm.xlu0 %959, %v942
        %v961 = vpop.permute.xlu0 %960
        %964 = vset.pattern.permute.xlu0 0
        %965 = vperm.xlu0 %964, %v943
        %v966 = vpop.permute.xlu0 %965
        %969 = vset.pattern.permute.xlu0 0
        %970 = vperm.xlu0 %969, %v944
        %v971 = vpop.permute.xlu0 %970
        %974 = vset.pattern.permute.xlu0 0
        %975 = vperm.xlu0 %974, %v945
        %v976 = vpop.permute.xlu0 %975
        %979 = vset.pattern.permute.xlu0 0
        %980 = vperm.xlu0 %979, %v946
        %v981 = vpop.permute.xlu0 %980
        %984 = vset.pattern.permute.xlu0 0
        %985 = vperm.xlu0 %984, %v947
        %v986 = vpop.permute.xlu0 %985
        %vm988 = vcmask 64512
        %v990 = vsel %vm988, %v932, 0
        %v993 = vsel %vm988, %v933, 0
        %v996 = vsel %vm988, %v934, 0
        %v999 = vsel %vm988, %v935, 0
        %v1002 = vsel %vm988, %v936, 0
        %v1005 = vsel %vm988, %v937, 0
        %v1008 = vsel %vm988, %v938, 0
        %v1011 = vsel %vm988, %v939, 0
        %1013 = vmatprep.subr.mxu0 %v931
        %1014 = vmatpush1.msra.mxu0 %v930
        %1015 = vmatprep.subr.mxu0 0.0
        %1016 = vmatpush1.msra.mxu0 0.0
        %1017 = vmatprep.subr.mxu0 0.0
        %1018 = vmatpush1.msra.mxu0 0.0
        %1019 = vmatprep.subr.mxu0 0.0
        %1020 = vmatpush1.msra.mxu0 0.0
        %1021 = vmatprep.subr.mxu0 0.0
        %1022 = vmatpush1.msra.mxu0 0.0
        %1023 = vmatprep.subr.mxu0 0.0
        %1024 = vmatpush1.msra.mxu0 0.0
        %1025 = vmatprep.subr.mxu0 0.0
        %1026 = vmatpush1.msra.mxu0 0.0
        %1027 = vmatprep.subr.mxu0 0.0
        %1028 = vmatpush1.msra.mxu0 0.0
        %1029 = vmatprep.subr.mxu0 0.0
        %1030 = vmatpush1.msra.mxu0 0.0
        %1031 = vmatprep.subr.mxu0 0.0
        %1032 = vmatpush1.msra.mxu0 0.0
        %1033 = vmatprep.subr.mxu0 0.0
        %1034 = vmatpush1.msra.mxu0 0.0
        %1035 = vmatprep.subr.mxu0 0.0
        %1036 = vmatpush1.msra.mxu0 0.0
        %1037 = vmatprep.subr.mxu0 0.0
        %1038 = vmatpush1.msra.mxu0 0.0
        %1039 = vmatprep.subr.mxu0 0.0
        %1040 = vmatpush1.msra.mxu0 0.0
        %1041 = vmatprep.subr.mxu0 0.0
        %1042 = vmatpush1.msra.mxu0 0.0
        %1043 = vmatprep.subr.mxu0 0.0
        %1044 = vmatpush1.msra.mxu0 0.0
        %1045 = vmatprep.subr.mxu0 0.0
        %1046 = vmatpush1.msra.mxu0 0.0
        %1047 = vmatprep.subr.mxu0 0.0
        %1048 = vmatpush1.msra.mxu0 0.0
        %1049 = vmatprep.subr.mxu0 0.0
        %1050 = vmatpush1.msra.mxu0 0.0
        %1051 = vmatprep.subr.mxu0 0.0
        %1052 = vmatpush1.msra.mxu0 0.0
        %1053 = vmatprep.subr.mxu0 0.0
        %1054 = vmatpush1.msra.mxu0 0.0
        %1055 = vmatprep.subr.mxu0 0.0
        %1056 = vmatpush1.msra.mxu0 0.0
        %1057 = vmatprep.subr.mxu0 0.0
        %1058 = vmatpush1.msra.mxu0 0.0
        %1059 = vmatprep.subr.mxu0 0.0
        %1060 = vmatpush1.msra.mxu0 0.0
        %1061 = vmatprep.subr.mxu0 0.0
        %1062 = vmatpush1.msra.mxu0 0.0
        %1063 = vmatprep.subr.mxu0 0.0
        %1064 = vmatpush1.msra.mxu0 0.0
        %1065 = vmatprep.subr.mxu0 0.0
        %1066 = vmatpush1.msra.mxu0 0.0
        %1067 = vmatprep.subr.mxu0 0.0
        %1068 = vmatpush1.msra.mxu0 0.0
        %1069 = vmatprep.subr.mxu0 0.0
        %1070 = vmatpush1.msra.mxu0 0.0
        %1071 = vmatprep.subr.mxu0 0.0
        %1072 = vmatpush1.msra.mxu0 0.0
        %1073 = vmatprep.subr.mxu0 0.0
        %1074 = vmatpush1.msra.mxu0 0.0
        %1075 = vmatprep.subr.mxu0 0.0
        %1076 = vmatpush1.msra.mxu0 0.0
        %1077 = vmatprep.mubr.f32.mxu0 0.0
        %1078 = vmatmul.mubr.f32.gmra.mrb[0].mxu0 %v990
        %v1079 = vpop.f32.mrb[0].mxu0
        %v1080 = vadd.f32 %v951, %v1079
        %v1081 = vpop.f32.mrb[0].mxu0
        %v1082 = vadd.f32 %v951, %v1081
        %1083 = vmatprep.mubr.f32.mxu0 0.0
        %1084 = vmatmul.mubr.f32.gmra.mrb[0].mxu0 %v993
        %v1085 = vpop.f32.mrb[0].mxu0
        %v1086 = vadd.f32 %v956, %v1085
        %v1087 = vpop.f32.mrb[0].mxu0
        %v1088 = vadd.f32 %v956, %v1087
        %1089 = vmatprep.mubr.f32.mxu0 0.0
        %1090 = vmatmul.mubr.f32.gmra.mrb[0].mxu0 %v996
        %v1091 = vpop.f32.mrb[0].mxu0
        %v1092 = vadd.f32 %v961, %v1091
        %v1093 = vpop.f32.mrb[0].mxu0
        %v1094 = vadd.f32 %v961, %v1093
        %1095 = vmatprep.mubr.f32.mxu0 0.0
        %1096 = vmatmul.mubr.f32.gmra.mrb[0].mxu0 %v999
        %v1097 = vpop.f32.mrb[0].mxu0
        %v1098 = vadd.f32 %v966, %v1097
        %v1099 = vpop.f32.mrb[0].mxu0
        %v1100 = vadd.f32 %v966, %v1099
        %1101 = vmatprep.mubr.f32.mxu0 0.0
        %1102 = vmatmul.mubr.f32.gmra.mrb[0].mxu0 %v1002
        %v1103 = vpop.f32.mrb[0].mxu0
        %v1104 = vadd.f32 %v971, %v1103
        %v1105 = vpop.f32.mrb[0].mxu0
        %v1106 = vadd.f32 %v971, %v1105
        %1107 = vmatprep.mubr.f32.mxu0 0.0
        %1108 = vmatmul.mubr.f32.gmra.mrb[0].mxu0 %v1005
        %v1109 = vpop.f32.mrb[0].mxu0
        %v1110 = vadd.f32 %v976, %v1109
        %v1111 = vpop.f32.mrb[0].mxu0
        %v1112 = vadd.f32 %v976, %v1111
        %1113 = vmatprep.mubr.f32.mxu0 0.0
        %1114 = vmatmul.mubr.f32.gmra.mrb[0].mxu0 %v1008
        %v1115 = vpop.f32.mrb[0].mxu0
        %v1116 = vadd.f32 %v981, %v1115
        %v1117 = vpop.f32.mrb[0].mxu0
        %v1118 = vadd.f32 %v981, %v1117
        %1119 = vmatprep.mubr.f32.mxu0 0.0
        %1120 = vmatmul.mubr.f32.gmra.mrb[0].mxu0 %v1011
        %v1121 = vpop.f32.mrb[0].mxu0
        %v1122 = vadd.f32 %v986, %v1121
        %v1123 = vpop.f32.mrb[0].mxu0
        %v1124 = vadd.f32 %v986, %v1123
        %1125 = vdwg.mxu0
        %v1126 = vmax.f32 %v1080, 0.0
        %v1127 = vmax.f32 %v1082, 0.0
        %v1128 = vmax.f32 %v1086, 0.0
        %v1129 = vmax.f32 %v1088, 0.0
        %v1130 = vmax.f32 %v1092, 0.0
        %v1131 = vmax.f32 %v1094, 0.0
        %v1132 = vmax.f32 %v1098, 0.0
        %v1133 = vmax.f32 %v1100, 0.0
        %v1134 = vmax.f32 %v1104, 0.0
        %v1135 = vmax.f32 %v1106, 0.0
        %v1136 = vmax.f32 %v1110, 0.0
        %v1137 = vmax.f32 %v1112, 0.0
        %v1138 = vmax.f32 %v1116, 0.0
        %v1139 = vmax.f32 %v1118, 0.0
        %v1140 = vmax.f32 %v1122, 0.0
        %v1141 = vmax.f32 %v1124, 0.0
        %v1142 = vld [vmem:[%s8] sm:$0xff]
        %v1143 = vld [vmem:[%s9] sm:$0xff]
        %1145 = vset.pattern.permute.xlu0 0
        %1146 = vperm.xlu0 %1145, %v1143
        %v1147 = vpop.permute.xlu0 %1146
        %v1150 = vsel %vm833, %v1142, 0
        %1152 = vmatprep.subr.mxu0 %v1127
        %1153 = vmatpush1.msra.mxu0 %v1126
        %1154 = vmatprep.subr.mxu0 %v1129
        %1155 = vmatpush1.msra.mxu0 %v1128
        %1156 = vmatprep.subr.mxu0 %v1131
        %1157 = vmatpush1.msra.mxu0 %v1130
        %1158 = vmatprep.subr.mxu0 %v1133
        %1159 = vmatpush1.msra.mxu0 %v1132
        %1160 = vmatprep.subr.mxu0 %v1135
        %1161 = vmatpush1.msra.mxu0 %v1134
        %1162 = vmatprep.subr.mxu0 %v1137
        %1163 = vmatpush1.msra.mxu0 %v1136
        %1164 = vmatprep.subr.mxu0 %v1139
        %1165 = vmatpush1.msra.mxu0 %v1138
        %1166 = vmatprep.subr.mxu0 %v1141
        %1167 = vmatpush1.msra.mxu0 %v1140
        %1168 = vmatprep.subr.mxu0 0.0
        %1169 = vmatpush1.msra.mxu0 0.0
        %1170 = vmatprep.subr.mxu0 0.0
        %1171 = vmatpush1.msra.mxu0 0.0
        %1172 = vmatprep.subr.mxu0 0.0
        %1173 = vmatpush1.msra.mxu0 0.0
        %1174 = vmatprep.subr.mxu0 0.0
        %1175 = vmatpush1.msra.mxu0 0.0
        %1176 = vmatprep.subr.mxu0 0.0
        %1177 = vmatpush1.msra.mxu0 0.0
        %1178 = vmatprep.subr.mxu0 0.0
        %1179 = vmatpush1.msra.mxu0 0.0
        %1180 = vmatprep.subr.mxu0 0.0
        %1181 = vmatpush1.msra.mxu0 0.0
        %1182 = vmatprep.subr.mxu0 0.0
        %1183 = vmatpush1.msra.mxu0 0.0
        %1184 = vmatprep.subr.mxu0 0.0
        %1185 = vmatpush1.msra.mxu0 0.0
        %1186 = vmatprep.subr.mxu0 0.0
        %1187 = vmatpush1.msra.mxu0 0.0
        %1188 = vmatprep.subr.mxu0 0.0
        %1189 = vmatpush1.msra.mxu0 0.0
        %1190 = vmatprep.subr.mxu0 0.0
        %1191 = vmatpush1.msra.mxu0 0.0
        %1192 = vmatprep.subr.mxu0 0.0
        %1193 = vmatpush1.msra.mxu0 0.0
        %1194 = vmatprep.subr.mxu0 0.0
        %1195 = vmatpush1.msra.mxu0 0.0
        %1196 = vmatprep.subr.mxu0 0.0
        %1197 = vmatpush1.msra.mxu0 0.0
        %1198 = vmatprep.subr.mxu0 0.0
        %1199 = vmatpush1.msra.mxu0 0.0
        %1200 = vmatprep.subr.mxu0 0.0
        %1201 = vmatpush1.msra.mxu0 0.0
        %1202 = vmatprep.subr.mxu0 0.0
        %1203 = vmatpush1.msra.mxu0 0.0
        %1204 = vmatprep.subr.mxu0 0.0
        %1205 = vmatpush1.msra.mxu0 0.0
        %1206 = vmatprep.subr.mxu0 0.0
        %1207 = vmatpush1.msra.mxu0 0.0
        %1208 = vmatprep.subr.mxu0 0.0
        %1209 = vmatpush1.msra.mxu0 0.0
        %1210 = vmatprep.subr.mxu0 0.0
        %1211 = vmatpush1.msra.mxu0 0.0
        %1212 = vmatprep.subr.mxu0 0.0
        %1213 = vmatpush1.msra.mxu0 0.0
        %1214 = vmatprep.subr.mxu0 0.0
        %1215 = vmatpush1.msra.mxu0 0.0
        %1216 = vmatprep.mubr.f32.mxu0 0.0
        %1217 = vmatmul.mubr.f32.gmra.mrb[0].mxu0 %v1150
        %v1218 = vpop.f32.mrb[0].mxu0
        %v1219 = vadd.f32 %v1147, %v1218
        %v1220 = vpop.f32.mrb[0].mxu0
        %v1221 = vadd.f32 %v1147, %v1220
        %1222 = vdwg.mxu0
        %1223 = vst [vmem:[%s395] sm:$0xff] %v1219
        %1224 = vst [vmem:[%s395 + $0x8] sm:$0xff] %v1221
        %s1225 = sand.u32 %s254, 1
        %s1226 = scalar_lea.sflag [#allocation5], %s1225
        %s1227 = sand.u32 %s254, 1
        %s1228 = smul.addr %s1227, 16
        %s1229 = scalar_lea.vmem [#allocation4], %s1228
        // Predicated region
        $region61: #{gated_ensembler.1} parent=59 // pred_check
          %p1230 = pneg %p264
        $region62: #{gated_ensembler.1} parent=59 // pred_check_branch
          %1232 = sbr.rel (%p1230) target = $region64
        $region63: #{gated_ensembler.1} parent=59 // pred_region
          %s1233 = smul.u32 2, %s26
          %s1234 = ssub.s32 3, %s1233
          %p1235 = scmp.lt.s32.totalorder %s1234, 2
          %s1236 = scalar_select %p1235, %s1234, 2
          %s1237 = smul.u32 128, %s1236
          %s1239 = ssub.s32 256, %s1237
          %1240 = vsyncadd %s1226, %s1239
          %p1241 = scmp.ne.s32.totalorder 0, %s1237
          %s1242 = smul.addr %s1233, 128
          %s1243 = scalar_lea.hbm %s10, %s1242
          %s1244 = smul.u32 %s1236, 8
          %s1245 = sshll.u32 %s1244, 4
          %s1246 = sshll.u32 %s1229, 4
          %s1247 = int_to_ptr.vmem [resolvable:$true] %s1246
          %1249 = dma.vmem_to_hbm [thread:$0]  (%p1241), %s1247, %s1245, %s1243, %s1226
        $region64: #{gated_ensembler.1} parent=59 // pred_fallthru
          _
      $region60: #{gated_ensembler.1} parent=5 // pred_fallthru
        _
      %p1250 = scmp.le.s32.totalorder 2, %s21
      // Predicated region
      $region65: #{gated_ensembler.1} parent=5 // pred_check
        %p1251 = pneg %p1250
      $region66: #{gated_ensembler.1} parent=5 // pred_check_branch
        %1253 = sbr.rel (%p1251) target = $region68
      $region67: #{gated_ensembler.1} parent=5 // pred_region
        %s1254 = ssub.s32 %s21, 2
        // Predicated region
        $region69: #{gated_ensembler.1} parent=67 // pred_check
          %p1255 = pneg %p270
        $region70: #{gated_ensembler.1} parent=67 // pred_check_branch
          %1257 = sbr.rel (%p1255) target = $region72
        $region71: #{gated_ensembler.1} parent=67 // pred_region
          %s1258 = sand.u32 %s255, 1
          %s1259 = scalar_lea.sflag [#allocation5], %s1258
          %s1260 = sand.u32 %s255, 1
          %s1261 = smul.addr %s1260, 16
          %s1262 = scalar_lea.vmem [#allocation4], %s1261
          %1263 = dma.done %s1259, 256
        $region72: #{gated_ensembler.1} parent=67 // pred_fallthru
          _
      $region68: #{gated_ensembler.1} parent=5 // pred_fallthru
        _
    $region6: #{gated_ensembler.1} parent=1 // loop_footer
      %s25 = sadd.s32 1, %s21
    $region7: #{gated_ensembler.1} parent=1 // loop_footer_branch
      %20 = sbr.rel target = $region3
    $region8: #{gated_ensembler.1} parent=1 // loop_exit
      _
    %1264 = vsyncpa [#allocation5], 1
    %s1265 = scalar_lea.sflag [#allocation5], 1
    %1266 = vsyncpa %s1265, 1

</llo_original>
